<compile_context>
chip_gen: v5e
topology: v5e:2x2
jax: 0.10.0
libtpu: 0.0.40
codegen_flags: <defaults>
</compile_context>

<pallas_src>
import jax
import jax.numpy as jnp
from jax.experimental import pallas as pl
from jax.experimental.pallas import tpu as pltpu


def _round_up(x: int, m: int) -> int:
    return ((x + m - 1) // m) * m


def _cdiv(a: int, b: int) -> int:
    return -(-a // b)


def _make_kernel(HW: int, T: int):
    ragged = (HW % T) != 0

    def kernel(x_ref, w_ref, o_ref):
        # x_ref/o_ref: (C, T) tile (batch dim squeezed); w_ref: (C, 1) scale.
        x = x_ref[...].astype(jnp.float32)                       # (C, T)
        if ragged:
            # Zero out-of-bounds lanes of the trailing tile so garbage from
            # the padded block can never produce NaN/Inf in the computation.
            t = pl.program_id(1)
            lane = jax.lax.broadcasted_iota(jnp.int32, x.shape, 1)
            x = jnp.where(lane < (HW - t * T), x, jnp.float32(0.0))
        # L2 norm over the channel (sublane) axis -> (1, T)
        sq_sum = jnp.sum(x * x, axis=0, keepdims=True)
        # Exact reciprocal (approx EUP rcp would risk the 1e-5 tolerance);
        # eps added after the sqrt, matching the PyTorch reference.
        inv = pl.reciprocal(jnp.sqrt(sq_sum) + jnp.float32(1e-10), approx=False)
        w = w_ref[...].astype(jnp.float32)                       # (C, 1)
        o_ref[...] = (w * (x * inv)).astype(o_ref.dtype)

    return kernel


def normalize(x_nchw: jax.Array, weight: jax.Array) -> jax.Array:
    """Learnable L2 normalization over the channel axis (ParseNet / SSD).

    Args:
      x_nchw: (N, C, H, W) input, matching PyTorch's NCHW convention.
      weight: (C,) per-channel scale.
    Returns:
      (N, C, H, W) output, same dtype as x_nchw.
    """
    N, C, H, W = x_nchw.shape
    HW = H * W
    itemsize = jnp.dtype(x_nchw.dtype).itemsize

    # Lane tile: multiple of 128, as large as a conservative VMEM budget
    # allows (in + out tiles, double-buffered -> 4 * C * T * itemsize), so it
    # fits every generation's scoped-VMEM default (v5e: 16 MiB) with headroom;
    # capped at 2048 lanes (mem-bound roofline saturates around 1-2K lanes).
    vmem_budget = 12 * 1024 * 1024
    t_vmem = max(128, ((vmem_budget // (4 * C * itemsize)) // 128) * 128)
    T = min(2048, t_vmem, _round_up(HW, 128))
    num_t = _cdiv(HW, T)

    # v7x has 2 TensorCores per chip: keep the (N, num_t) grid size even so
    # both cores get work even at batch 1 (SSD conv4_3: N=1, HW=1444).
    if (N * num_t) % 2 == 1 and HW > 128:
        T = max(128, _round_up(_cdiv(HW, num_t + 1), 128))
        num_t = _cdiv(HW, T)

    # Free row-major reshapes (no data movement, unlike the old pad/slice).
    x = x_nchw.reshape(N, C, HW)
    w = weight.reshape(C, 1).astype(jnp.float32)

    cost = pl.CostEstimate(
        flops=4 * N * C * HW,                     # sq, sum, *inv, *w
        transcendentals=2 * N * HW,               # sqrt + reciprocal per lane
        bytes_accessed=2 * N * C * HW * itemsize + C * 4,
    )

    out = pl.pallas_call(
        _make_kernel(HW, T),
        out_shape=jax.ShapeDtypeStruct((N, C, HW), x_nchw.dtype),
        grid_spec=pltpu.PrefetchScalarGridSpec(
            num_scalar_prefetch=0,
            grid=(N, num_t),
            in_specs=[
                pl.BlockSpec((pl.Squeezed(), C, T), lambda n, t: (n, 0, t)),
                pl.BlockSpec((C, 1), lambda n, t: (0, 0)),   # resident weight
            ],
            out_specs=pl.BlockSpec((pl.Squeezed(), C, T), lambda n, t: (n, 0, t)),
        ),
        compiler_params=pltpu.CompilerParams(
            # Channel reduction stays inside one block -> both grid axes are
            # embarrassingly parallel (megacore-shardable on v7x).
            dimension_semantics=("parallel", "parallel"),
            vmem_limit_bytes=32 * 1024 * 1024,
        ),
        cost_estimate=cost,
    )(x, w)

    return out.reshape(N, C, H, W)


def _reference(x_nchw, weight, eps=1e-10):
    norm = jnp.sqrt(jnp.sum(x_nchw.astype(jnp.float32) ** 2, axis=1,
                            keepdims=True)) + eps
    return weight[None, :, None, None] * (x_nchw / norm)


if __name__ == "__main__":
    key = jax.random.PRNGKey(0)
    kx, kw = jax.random.split(key)

    # Small smoke-test shape consistent with the module (SSD uses C=512).
    N, C, H, W = 2, 4, 16, 16
    x = jax.random.normal(kx, (N, C, H, W), dtype=jnp.float32)
    # SSD typically initializes this scale to 20; perturb slightly so the
    # per-channel broadcast is exercised.
    weight = jnp.float32(20.0) + 0.1 * jax.random.normal(kw, (C,),
                                                         dtype=jnp.float32)

    out = jax.block_until_ready(normalize(x, weight))
    ref = _reference(x, weight)
    assert out.shape == (N, C, H, W)
    assert jnp.allclose(out, ref, atol=1e-5, rtol=1e-5), "mismatch vs reference"

    # Ragged-spatial + odd-grid case: exercises the in-kernel tail lane mask
    # and the even-grid split (HW = 169 is not a multiple of 128).
    x2 = jax.random.normal(jax.random.PRNGKey(1), (1, 8, 13, 13),
                           dtype=jnp.float32)
    w2 = jnp.full((8,), 20.0, dtype=jnp.float32)
    out2 = jax.block_until_ready(normalize(x2, w2))
    assert jnp.allclose(out2, _reference(x2, w2), atol=1e-5, rtol=1e-5), \
        "mismatch vs reference (ragged case)"

    print("KERNEL_OK")
</pallas_src>

<mosaic_0001>
module attributes {stable_mosaic.version = 11 : i64} {
  func.func @kernel(%arg0: i32, %arg1: i32, %arg2: memref<1x4x256xf32, #tpu.memory_space<vmem>>, %arg3: memref<4x1xf32, #tpu.memory_space<vmem>>, %arg4: memref<1x4x256xf32, #tpu.memory_space<vmem>>) attributes {dimension_semantics = [#tpu.dimension_semantics<parallel>, #tpu.dimension_semantics<parallel>], iteration_bounds = array<i64: 2, 1>, scalar_prefetch = 0 : i64, scratch_operands = 0 : i64, tpu.core_type = #tpu.core_type<tc>, window_params = [{transform_indices = @transform_0, window_bounds = array<i64: 1, 4, 256>}, {pipeline_mode = #tpu.pipeline_mode<synchronous>, transform_indices = @transform_1, window_bounds = array<i64: 4, 1>}, {transform_indices = @transform_2, window_bounds = array<i64: 1, 4, 256>}]} {
    %c0 = arith.constant 0 : index
    %c0_0 = arith.constant 0 : index
    %c0_1 = arith.constant 0 : index
    %0 = vector.load %arg2[%c0, %c0_0, %c0_1] : memref<1x4x256xf32, #tpu.memory_space<vmem>>, vector<1x4x256xf32>
    %1 = vector.shape_cast %0 : vector<1x4x256xf32> to vector<4x256xf32>
    %2 = arith.mulf %1, %1 : vector<4x256xf32>
    %cst = arith.constant dense<0.000000e+00> : vector<256xf32>
    %3 = vector.multi_reduction <add>, %2, %cst [0] : vector<4x256xf32> to vector<256xf32>
    %4 = vector.shape_cast %3 : vector<256xf32> to vector<1x256xf32>
    %5 = math.sqrt %4 : vector<1x256xf32>
    %cst_2 = arith.constant 1.000000e-10 : f32
    %6 = vector.broadcast %cst_2 : f32 to vector<1x256xf32>
    %7 = arith.addf %5, %6 : vector<1x256xf32>
    %8 = tpu.reciprocal %7 : vector<1x256xf32> -> vector<1x256xf32>
    %c0_3 = arith.constant 0 : index
    %c0_4 = arith.constant 0 : index
    %9 = vector.load %arg3[%c0_3, %c0_4] : memref<4x1xf32, #tpu.memory_space<vmem>>, vector<4x1xf32>
    %10 = vector.broadcast %8 : vector<1x256xf32> to vector<4x256xf32>
    %11 = arith.mulf %1, %10 : vector<4x256xf32>
    %12 = vector.broadcast %9 : vector<4x1xf32> to vector<4x256xf32>
    %13 = arith.mulf %12, %11 : vector<4x256xf32>
    %c0_5 = arith.constant 0 : index
    %c0_6 = arith.constant 0 : index
    %c0_7 = arith.constant 0 : index
    %14 = vector.load %arg4[%c0_5, %c0_6, %c0_7] : memref<1x4x256xf32, #tpu.memory_space<vmem>>, vector<1x4x256xf32>
    %15 = vector.shape_cast %14 : vector<1x4x256xf32> to vector<4x256xf32>
    %16 = vector.shape_cast %13 : vector<4x256xf32> to vector<1x4x256xf32>
    tpu.vector_store %arg4[%c0_5, %c0_6, %c0_7], %16 {strides = array<i32>} : memref<1x4x256xf32, #tpu.memory_space<vmem>>, vector<1x4x256xf32>,
    return
  }
  func.func @transform_0(%arg0: i32, %arg1: i32) -> (i32, i32, i32) {
    %c0_i32 = arith.constant 0 : i32
    %c0_i32_0 = arith.constant 0 : i32
    return %arg0, %c0_i32, %arg1 : i32, i32, i32
  }
  func.func @transform_1(%arg0: i32, %arg1: i32) -> (i32, i32) {
    %c0_i32 = arith.constant 0 : i32
    %c0_i32_0 = arith.constant 0 : i32
    %c0_i32_1 = arith.constant 0 : i32
    return %c0_i32, %c0_i32_0 : i32, i32
  }
  func.func @transform_2(%arg0: i32, %arg1: i32) -> (i32, i32, i32) {
    %c0_i32 = arith.constant 0 : i32
    %c0_i32_0 = arith.constant 0 : i32
    return %arg0, %c0_i32, %arg1 : i32, i32, i32
  }
}

</mosaic_0001>

<llo_original>
// kernel: tpu_custom_call.1
$region0: #{tpu_custom_call.1}
  #allocation0 [shape = 'u32[]', space=smem, size = 0x4, offset = 0x4, fixed_abs, tag = 'smem constant byte address 0x4 - core index']
  #allocation1 [shape = 'u32[72,128]{1,0:T(1,128)}', space=vmem, size = 0x9000, scoped, tag = 'internal scratch']
  %s0 = inlined_call_operand.hbm [shape: f32[2,4,256], index: 0, kind: input, shape index: {}]
  %s1 = inlined_call_operand.vmem [shape: f32[4,1], index: 1, kind: input, shape index: {}]
  %s2 = inlined_call_operand.hbm [shape: f32[2,4,256], index: 2, kind: output, shape index: {}]
  %s3 = sld [smem:[#allocation0]]
  $region45: #{tpu_custom_call.1} parent=0
    _
  %s5 = ssub.s32 1, %s3
  %s6 = scalar_select 0, %s5, %s3
  $region1: #{tpu_custom_call.1} parent=0
    #allocation2 [shape = 'u8[8192]{0}', space=vmem, size = 0x2000, scoped, tag = 'input window, operand 0']
    #allocation3 [shape = 's32[2]{0}', space=sflag, size = 0x8, scoped, tag = 'scoped memory for tpu_custom_call.1']
    #allocation4 [shape = 's32[2]{0}', space=sflag, size = 0x8, scoped, tag = 'scoped memory for tpu_custom_call.1']
    #allocation5 [shape = 'u8[8192]{0}', space=vmem, size = 0x2000, scoped, tag = 'output window, operand 0']
    %7 = vsyncpa [#allocation3], 0
    %s8 = scalar_lea.sflag [#allocation3], 1
    %9 = vsyncpa %s8, 0
    %10 = vsyncpa [#allocation4], 0
    %s11 = scalar_lea.sflag [#allocation4], 1
    %12 = vsyncpa %s11, 0
    loop: start=0, step=1, limit=4
    $region2: #{tpu_custom_call.1} parent=1 // loop_pre_header
      _
    $region3: #{tpu_custom_call.1} parent=1 // loop_header
      %s14 = sphi 0, %s18
      %p15 = scmp.ge.s32.totalorder %s14, 4
      %s21 = sphi 0, %s33
      %s22 = sphi 0, %s29
      %s23 = sphi 0, %s21
      %s24 = sphi 0, %s22
      %s25 = sphi 0, %s23
      %s26 = sphi 0, %s24
      %s38 = sphi 0, %s40
      %s41 = sphi 0, %s38
      %s42 = sphi 0, %s41
      %s58 = sphi 0, %s42
      %s62 = sphi 0, %s62
      %s64 = sphi 0, %s62
      %s65 = sphi 0, %s64
      %s79 = sphi 0, %s65
      %s87 = sphi 0, %s89
      %s90 = sphi 0, %s87
      %s91 = sphi 0, %s90
      %s107 = sphi 0, %s91
    $region4: #{tpu_custom_call.1} parent=1 // loop_header_branch
      %17 = sbr.rel (%p15) target = $region8
    $region5: #{tpu_custom_call.1} parent=1 // loop_body
      %s19 = ssub.s32 %s14, 1
      %s20 = ssub.s32 %s14, 2
      %s27 = sadd.s32 1, %s22
      %p28 = scmp.ge.s32.totalorder %s27, 1
      %s29 = scalar_select %p28, 0, %s27
      %s30 = sadd.s32 1, %s21
      %s31 = scalar_select %p28, %s30, %s21
      %p32 = scmp.ge.s32.totalorder %s31, 2
      %s33 = scalar_select %p32, 0, %s31
      %s34 = ssub.s32 %s21, %s33
      %s35 = ssub.s32 %s22, %s29
      %s36 = sor.u32 %s34, %s35
      %p37 = scmp.eq.s32.totalorder %s36, 0
      %s39 = sadd.s32 %s38, 1
      %s40 = scalar_select %p37, %s38, %s39
      %p43 = pneg %p37
      %p44 = scmp.eq.s32.totalorder %s14, 1
      %p45 = por %p43, %p44
      %p46 = scmp.ne.s32.totalorder %s38, %s41
      %p47 = scmp.eq.s32.totalorder %s14, 0
      %p48 = por %p46, %p47
      %p49 = scmp.ne.s32.totalorder %s38, %s41
      %p50 = scmp.eq.s32.totalorder %s19, 1
      %p51 = por %p49, %p50
      %p52 = scmp.ne.s32.totalorder %s41, %s42
      %p53 = scmp.eq.s32.totalorder %s19, 0
      %p54 = por %p52, %p53
      %p55 = scmp.ne.s32.totalorder %s41, %s42
      %p56 = scmp.eq.s32.totalorder %s20, 1
      %p57 = por %p55, %p56
      %p59 = scmp.ne.s32.totalorder %s42, %s58
      %p60 = scmp.eq.s32.totalorder %s20, 0
      %p61 = por %p59, %p60
      %s63 = sadd.s32 %s62, 1
      %p66 = scmp.eq.s32.totalorder %s14, 1
      %p67 = scmp.ne.s32.totalorder %s62, %s64
      %p68 = scmp.eq.s32.totalorder %s14, 0
      %p69 = por %p67, %p68
      %p70 = scmp.ne.s32.totalorder %s62, %s64
      %p71 = scmp.eq.s32.totalorder %s19, 1
      %p72 = por %p70, %p71
      %p73 = scmp.ne.s32.totalorder %s64, %s65
      %p74 = scmp.eq.s32.totalorder %s19, 0
      %p75 = por %p73, %p74
      %p76 = scmp.ne.s32.totalorder %s64, %s65
      %p77 = scmp.eq.s32.totalorder %s20, 1
      %p78 = por %p76, %p77
      %p80 = scmp.ne.s32.totalorder %s65, %s79
      %p81 = scmp.eq.s32.totalorder %s20, 0
      %p82 = por %p80, %p81
      %s83 = ssub.s32 %s21, %s33
      %s84 = ssub.s32 %s22, %s29
      %s85 = sor.u32 %s83, %s84
      %p86 = scmp.eq.s32.totalorder %s85, 0
      %s88 = sadd.s32 %s87, 1
      %s89 = scalar_select %p86, %s87, %s88
      %p92 = pneg %p86
      %p93 = scmp.eq.s32.totalorder %s14, 1
      %p94 = por %p92, %p93
      %p95 = scmp.ne.s32.totalorder %s87, %s90
      %p96 = scmp.eq.s32.totalorder %s14, 0
      %p97 = por %p95, %p96
      %p98 = scmp.ne.s32.totalorder %s87, %s90
      %p99 = scmp.eq.s32.totalorder %s19, 1
      %p100 = por %p98, %p99
      %p101 = scmp.ne.s32.totalorder %s90, %s91
      %p102 = scmp.eq.s32.totalorder %s19, 0
      %p103 = por %p101, %p102
      %p104 = scmp.ne.s32.totalorder %s90, %s91
      %p105 = scmp.eq.s32.totalorder %s20, 1
      %p106 = por %p104, %p105
      %p108 = scmp.ne.s32.totalorder %s91, %s107
      %p109 = scmp.eq.s32.totalorder %s20, 0
      %p110 = por %p108, %p109
      %p111 = scmp.le.s32.totalorder 1, %s14
      %p112 = scmp.lt.s32.totalorder %s14, 3
      %p113 = pnand %p111, %p112
      %p114 = pneg %p113
      // Predicated region
      $region9: #{tpu_custom_call.1} parent=5 // pred_check
        _
      $region10: #{tpu_custom_call.1} parent=5 // pred_check_branch
        %116 = sbr.rel (%p113) target = $region12
      $region11: #{tpu_custom_call.1} parent=5 // pred_region
        %s117 = ssub.s32 %s14, 1
        // Predicated region
        $region13: #{tpu_custom_call.1} parent=11 // pred_check
          %p118 = pneg %p75
        $region14: #{tpu_custom_call.1} parent=11 // pred_check_branch
          %120 = sbr.rel (%p118) target = $region16
        $region15: #{tpu_custom_call.1} parent=11 // pred_region
          _
        $region16: #{tpu_custom_call.1} parent=11 // pred_fallthru
          _
      $region12: #{tpu_custom_call.1} parent=5 // pred_fallthru
        _
      %p121 = scmp.lt.s32.totalorder %s14, 2
      // Predicated region
      $region17: #{tpu_custom_call.1} parent=5 // pred_check
        %p122 = pneg %p121
      $region18: #{tpu_custom_call.1} parent=5 // pred_check_branch
        %124 = sbr.rel (%p122) target = $region20
      $region19: #{tpu_custom_call.1} parent=5 // pred_region
        // Predicated region
        $region21: #{tpu_custom_call.1} parent=19 // pred_check
          %p125 = pneg %p48
        $region22: #{tpu_custom_call.1} parent=19 // pred_check_branch
          %127 = sbr.rel (%p125) target = $region24
        $region23: #{tpu_custom_call.1} parent=19 // pred_region
          %s128 = sand.u32 %s38, 1
          %s129 = scalar_lea.sflag [#allocation3], %s128
          %s130 = sand.u32 %s38, 1
          %s131 = smul.addr %s130, 8
          %s132 = scalar_lea.vmem [#allocation2], %s131
          %s133 = smul.u32 2, %s22
          %135 = vsyncadd %s129, 0
          %s136 = smul.addr %s21, 2
          %s137 = sadd.s32 %s133, %s136
          %s138 = smul.addr %s137, 4
          %s139 = scalar_lea.hbm %s0, %s138
          %s141 = sshll.u32 %s139, 4
          %s142 = int_to_ptr.hbm [resolvable:$true] %s141
          %s143 = sshll.u32 %s132, 4
          %s144 = int_to_ptr.vmem [resolvable:$true] %s143
          %146 = dma.hbm_to_vmem [thread:$0]  %s142, 128, %s144, %s129
        $region24: #{tpu_custom_call.1} parent=19 // pred_fallthru
          _
      $region20: #{tpu_custom_call.1} parent=5 // pred_fallthru
        _
      %p147 = scmp.le.s32.totalorder 1, %s14
      %p148 = scmp.lt.s32.totalorder %s14, 3
      %p149 = pnand %p147, %p148
      %p150 = pneg %p149
      // Predicated region
      $region25: #{tpu_custom_call.1} parent=5 // pred_check
        _
      $region26: #{tpu_custom_call.1} parent=5 // pred_check_branch
        %152 = sbr.rel (%p149) target = $region28
      $region27: #{tpu_custom_call.1} parent=5 // pred_region
        %s153 = ssub.s32 %s14, 1
        %s154 = sand.u32 %s41, 1
        %s155 = scalar_lea.sflag [#allocation3], %s154
        %s156 = sand.u32 %s41, 1
        %s157 = smul.addr %s156, 8
        %s158 = scalar_lea.vmem [#allocation2], %s157
        // Predicated region
        $region29: #{tpu_custom_call.1} parent=27 // pred_check
          %p159 = pneg %p54
        $region30: #{tpu_custom_call.1} parent=27 // pred_check_branch
          %161 = sbr.rel (%p159) target = $region32
        $region31: #{tpu_custom_call.1} parent=27 // pred_region
          %163 = dma.done %s155, 128
        $region32: #{tpu_custom_call.1} parent=27 // pred_fallthru
          _
        %s164 = sand.u32 %s41, 1
        %s165 = scalar_lea.sflag [#allocation3], %s164
        %s166 = sand.u32 %s41, 1
        %s167 = smul.addr %s166, 8
        %s168 = scalar_lea.vmem [#allocation2], %s167
        %p169 = pneg %p54
        %p170 = pneg %p51
        %p171 = pneg %p75
        %p172 = pneg %p72
        %p173 = pneg %p103
        %p174 = pneg %p100
        %s175 = sand.u32 %s90, 1
        %s176 = scalar_lea.sflag [#allocation4], %s175
        %s177 = sand.u32 %s90, 1
        %s178 = smul.addr %s177, 8
        %s179 = scalar_lea.vmem [#allocation5], %s178
        %s180 = smul.u32 2, %s24
        %s181 = smul.u32 2, %s24
        %v182 = vld [vmem:[%s158] sm:$0xff]
        %v183 = vmul.f32 %v182, %v182
        %185 = vst [vmem:[#allocation1] ss:$2 sm:$0xff] %v183
        %v186 = vld.sshfl [vmem:[#allocation1] sm:$0xff pattern:$0x75316420]
        %v187 = vld.sshfl [vmem:[#allocation1 + $0x8] sm:$0xff pattern:$0x75316420]
        %vm190 = vcmask 1043456
        %v191 = vsel %vm190, %v186, 0.0
        %v192 = vrot.slane %v191, 4
        %v193 = vadd.f32 %v191, %v192
        %v194 = vrot.slane %v193, 2
        %v195 = vadd.f32 %v193, %v194
        %v196 = vrot.slane %v195, 1
        %v197 = vadd.f32 %v195, %v196
        %v198 = vsel %vm190, %v187, 0.0
        %v199 = vrot.slane %v198, 4
        %v200 = vadd.f32 %v198, %v199
        %v201 = vrot.slane %v200, 2
        %v202 = vadd.f32 %v200, %v201
        %v203 = vrot.slane %v202, 1
        %v204 = vadd.f32 %v202, %v203
        %v205 = vrsqrt.pop %v197
        %v206 = vmul.f32 %v205, %v197
        %v207 = vmul.f32 %v206, %v205
        %v208 = vmul.f32 0.5, %v207
        %v209 = vsub.f32 1.5, %v208
        %v210 = vmul.f32 %v205, %v209
        %v211 = vmul.f32 %v197, %v210
        %vm212 = vcmp.eq.f32.partialorder %v197, inf
        %v213 = vsel %vm212, %v197, %v211
        %vm214 = vcmp.eq.f32.partialorder %v197, 0.0
        %v215 = vand.u32 %v197, 2147483648
        %v216 = vsel %vm214, %v215, %v213
        %v217 = vrsqrt.pop %v204
        %v218 = vmul.f32 %v217, %v204
        %v219 = vmul.f32 %v218, %v217
        %v220 = vmul.f32 0.5, %v219
        %v221 = vsub.f32 1.5, %v220
        %v222 = vmul.f32 %v217, %v221
        %v223 = vmul.f32 %v204, %v222
        %vm224 = vcmp.eq.f32.partialorder %v204, inf
        %v225 = vsel %vm224, %v204, %v223
        %vm226 = vcmp.eq.f32.partialorder %v204, 0.0
        %v227 = vand.u32 %v204, 2147483648
        %v228 = vsel %vm226, %v227, %v225
        %v229 = vadd.f32 %v216, 1e-10
        %v230 = vadd.f32 %v228, 1e-10
        %v231 = vrcp.pop %v229
        %v232 = vmul.f32 %v229, %v231
        %v233 = vsub.f32 1.0, %v232
        %v234 = vmul.f32 %v231, %v233
        %v235 = vadd.f32 %v231, %v234
        %vm236 = vweird.f32 %v229
        %vm237 = vweird.f32 %v231
        %vm238 = vmor %vm236, %vm237
        %v239 = vsel %vm238, %v231, %v235
        %v240 = vand.u32 2147483647, %v229
        %vm241 = vcmp.eq.f32.partialorder %v240, 8.507059e+37
        %v242 = vand.u32 %v229, 2147483648
        %v243 = vor.u32 1.1754944e-38, %v242
        %v244 = vsel %vm241, %v243, %v239
        %v245 = vrcp.pop %v230
        %v246 = vmul.f32 %v230, %v245
        %v247 = vsub.f32 1.0, %v246
        %v248 = vmul.f32 %v245, %v247
        %v249 = vadd.f32 %v245, %v248
        %vm250 = vweird.f32 %v230
        %vm251 = vweird.f32 %v245
        %vm252 = vmor %vm250, %vm251
        %v253 = vsel %vm252, %v245, %v249
        %v254 = vand.u32 2147483647, %v230
        %vm255 = vcmp.eq.f32.partialorder %v254, 8.507059e+37
        %v256 = vand.u32 %v230, 2147483648
        %v257 = vor.u32 1.1754944e-38, %v256
        %v258 = vsel %vm255, %v257, %v253
        %v259 = vld [vmem:[%s1] sm:$0xf]
        %v262 = vrot.slane %v258, 4
        %v263 = vsel %vm190, %v244, %v262
        %v265 = vmul.f32 %v182, %v263
        %267 = vset.pattern.permute.xlu0 0
        %268 = vperm.xlu0 %267, %v259
        %v269 = vpop.permute.xlu0 %268
        %272 = vst [vmem:[#allocation1] ss:$2 sm:$0xff] %v265
        %v273 = vld.sshfl [vmem:[#allocation1] sm:$0xff pattern:$0x75316420]
        %v274 = vld.sshfl [vmem:[#allocation1 + $0x8] sm:$0xff pattern:$0x75316420]
        %v277 = vmul.f32 %v269, %v273
        %v278 = vmul.f32 %v269, %v274
        %v281 = vrot.slane %v278, 4
        %v282 = vsel %vm190, %v277, %v281
        %284 = vst [vmem:[%s179] sm:$0xff] %v282
        %s285 = sand.u32 %s90, 1
        %s286 = scalar_lea.sflag [#allocation4], %s285
        %s287 = sand.u32 %s90, 1
        %s288 = smul.addr %s287, 8
        %s289 = scalar_lea.vmem [#allocation5], %s288
        // Predicated region
        $region33: #{tpu_custom_call.1} parent=27 // pred_check
          %p290 = pneg %p100
        $region34: #{tpu_custom_call.1} parent=27 // pred_check_branch
          %292 = sbr.rel (%p290) target = $region36
        $region35: #{tpu_custom_call.1} parent=27 // pred_region
          %s293 = smul.u32 2, %s24
          %295 = vsyncadd %s286, 0
          %s296 = smul.addr %s23, 2
          %s297 = sadd.s32 %s293, %s296
          %s298 = smul.addr %s297, 4
          %s299 = scalar_lea.hbm %s2, %s298
          %s301 = sshll.u32 %s289, 4
          %s302 = int_to_ptr.vmem [resolvable:$true] %s301
          %s303 = sshll.u32 %s299, 4
          %s304 = int_to_ptr.hbm [resolvable:$true] %s303
          %306 = dma.vmem_to_hbm [thread:$0]  %s302, 128, %s304, %s286
        $region36: #{tpu_custom_call.1} parent=27 // pred_fallthru
          _
      $region28: #{tpu_custom_call.1} parent=5 // pred_fallthru
        _
      %p307 = scmp.le.s32.totalorder 2, %s14
      // Predicated region
      $region37: #{tpu_custom_call.1} parent=5 // pred_check
        %p308 = pneg %p307
      $region38: #{tpu_custom_call.1} parent=5 // pred_check_branch
        %310 = sbr.rel (%p308) target = $region40
      $region39: #{tpu_custom_call.1} parent=5 // pred_region
        %s311 = ssub.s32 %s14, 2
        // Predicated region
        $region41: #{tpu_custom_call.1} parent=39 // pred_check
          %p312 = pneg %p106
        $region42: #{tpu_custom_call.1} parent=39 // pred_check_branch
          %314 = sbr.rel (%p312) target = $region44
        $region43: #{tpu_custom_call.1} parent=39 // pred_region
          %s315 = sand.u32 %s91, 1
          %s316 = scalar_lea.sflag [#allocation4], %s315
          %s317 = sand.u32 %s91, 1
          %s318 = smul.addr %s317, 8
          %s319 = scalar_lea.vmem [#allocation5], %s318
          %321 = dma.done %s316, 128
        $region44: #{tpu_custom_call.1} parent=39 // pred_fallthru
          _
      $region40: #{tpu_custom_call.1} parent=5 // pred_fallthru
        _
    $region6: #{tpu_custom_call.1} parent=1 // loop_footer
      %s18 = sadd.s32 1, %s14
    $region7: #{tpu_custom_call.1} parent=1 // loop_footer_branch
      %13 = sbr.rel target = $region3
    $region8: #{tpu_custom_call.1} parent=1 // loop_exit
      _
    %322 = vsyncpa [#allocation3], 1
    %s323 = scalar_lea.sflag [#allocation3], 1
    %324 = vsyncpa %s323, 1
    %325 = vsyncpa [#allocation4], 1
    %s326 = scalar_lea.sflag [#allocation4], 1
    %327 = vsyncpa %s326, 1

</llo_original>
